<compile_context>
chip_gen: v5e
topology: v5e:2x2
jax: 0.10.0
libtpu: 0.0.40
codegen_flags: <defaults>
</compile_context>

<pallas_src>
import functools

import jax
import jax.numpy as jnp
from jax.experimental import pallas as pl
from jax.experimental.pallas import tpu as pltpu


def _stego_kernel(x_ref, wcat_ref, b2a_ref, w2b_ref, bout_ref, o_ref, *, nc_p):
    x = x_ref[...]                                                   # (C, T) bf16
    # Fused stage 1: one MXU matmul produces [y1 ; pre-relu hidden].
    z = jnp.dot(wcat_ref[...], x,
                preferred_element_type=jnp.float32)                  # (nc_p + C, T) f32
    y1 = z[:nc_p, :]                                                 # sublane-aligned slice
    h = jnp.maximum(z[nc_p:, :] + b2a_ref[...], 0.0)                 # (C, T) f32
    y2 = jnp.dot(w2b_ref[...], h.astype(w2b_ref.dtype),
                 preferred_element_type=jnp.float32)                 # (nc_p, T) f32
    o_ref[...] = (y1 + y2 + bout_ref[...]).astype(o_ref.dtype)


def stego_seg_head(x_nchw, params, *, tile_hw=2048, compute_dtype=jnp.bfloat16):
    """x_nchw: (B, C, H, W) f32.  params are in PyTorch Conv2d (out_ch, in_ch)
    orientation.  Returns (B, n_classes, H, W) f32."""
    B, C, H, W = x_nchw.shape
    w1, b1, w2a, b2a, w2b, b2b = params        # (nc,C),(nc,),(C,C),(C,),(nc,C),(nc,)
    nc = w1.shape[0]
    nc_p = ((nc + 7) // 8) * 8                 # pad classes to a sublane multiple

    HW = H * W
    # Clamp the spatial tile to the (128-rounded) spatial extent; pad the tail
    # instead of asserting divisibility.  Per-step VMEM (double-buffered):
    # x: C*tile*2B, out: nc_p*tile*4B -- tiny vs the 16/32 MiB scoped defaults.
    tile_hw = min(tile_hw, ((HW + 127) // 128) * 128)
    n_tiles = pl.cdiv(HW, tile_hw)
    HW_pad = n_tiles * tile_hw

    x_rows = x_nchw.reshape(B, C, HW)          # pure reshape, no transpose
    if HW_pad != HW:
        x_rows = jnp.pad(x_rows, ((0, 0), (0, 0), (0, HW_pad - HW)))
    x_rows = x_rows.astype(compute_dtype)

    pad_rows = nc_p - nc
    w1_p = jnp.pad(w1, ((0, pad_rows), (0, 0)))
    w2b_p = jnp.pad(w2b, ((0, pad_rows), (0, 0)))
    # Fused output bias: y1 + y2 + (b1 + b2b).
    b_out = jnp.pad(b1 + b2b, ((0, pad_rows),)).reshape(nc_p, 1).astype(jnp.float32)
    b2a_col = b2a.reshape(C, 1).astype(jnp.float32)

    # Fused stage-1 weight: [W1 ; W2a] so one matmul feeds both branches.
    w_cat = jnp.concatenate([w1_p, w2a], axis=0).astype(compute_dtype)   # (nc_p+C, C)
    w2b_c = w2b_p.astype(compute_dtype)                                  # (nc_p, C)

    kernel = functools.partial(_stego_kernel, nc_p=nc_p)
    full = lambda b, t: (0, 0)

    out = pl.pallas_call(
        kernel,
        out_shape=jax.ShapeDtypeStruct((B, nc_p, HW_pad), jnp.float32),
        grid_spec=pltpu.PrefetchScalarGridSpec(
            num_scalar_prefetch=0,
            grid=(B, n_tiles),
            in_specs=[
                pl.BlockSpec((None, C, tile_hw), lambda b, t: (b, 0, t)),  # x tile
                pl.BlockSpec((nc_p + C, C), full),                         # [W1;W2a]
                pl.BlockSpec((C, 1), full),                                # b2a
                pl.BlockSpec((nc_p, C), full),                             # W2b
                pl.BlockSpec((nc_p, 1), full),                             # b1+b2b
            ],
            out_specs=pl.BlockSpec((None, nc_p, tile_hw), lambda b, t: (b, 0, t)),
        ),
        compiler_params=pltpu.CompilerParams(
            dimension_semantics=("parallel", "parallel")),
    )(x_rows, w_cat, b2a_col, w2b_c, b_out)

    # Drop class/spatial padding; reshape back to NCHW (no transpose needed).
    return out[:, :nc, :HW].reshape(B, nc, H, W)


def init_params(key, feature_dim, n_classes, dtype=jnp.float32):
    """Deterministic synthetic parameters, PyTorch Conv2d (out_ch, in_ch) layout."""
    k1, k2, k3, k4, k5, k6 = jax.random.split(key, 6)
    scale = 1.0 / jnp.sqrt(feature_dim)
    w1 = jax.random.uniform(k1, (n_classes, feature_dim), dtype, -scale, scale)
    b1 = jax.random.uniform(k2, (n_classes,), dtype, -scale, scale)
    w2a = jax.random.uniform(k3, (feature_dim, feature_dim), dtype, -scale, scale)
    b2a = jax.random.uniform(k4, (feature_dim,), dtype, -scale, scale)
    w2b = jax.random.uniform(k5, (n_classes, feature_dim), dtype, -scale, scale)
    b2b = jax.random.uniform(k6, (n_classes,), dtype, -scale, scale)
    return (w1, b1, w2a, b2a, w2b, b2b)


def reference_jax(x_nchw, params, matmul_dtype=jnp.float32):
    """Plain-JAX reference matching the PyTorch forward pass.  matmul_dtype lets
    us build a reference with the same bf16 operand quantization as the kernel."""
    w1, b1, w2a, b2a, w2b, b2b = params
    xc = x_nchw.astype(matmul_dtype)
    mm = lambda inp, w: jnp.einsum('bchw,oc->bohw', inp, w.astype(matmul_dtype),
                                   preferred_element_type=jnp.float32)
    y1 = mm(xc, w1) + b1[None, :, None, None]
    h = jax.nn.relu(mm(xc, w2a) + b2a[None, :, None, None])
    y2 = mm(h.astype(matmul_dtype), w2b) + b2b[None, :, None, None]
    return y1 + y2


if __name__ == "__main__":
    B, feature_dim, H, W = 2, 32, 16, 16
    n_classes = 8

    key = jax.random.PRNGKey(0)
    kx, kp = jax.random.split(key)
    x = jax.random.normal(kx, (B, feature_dim, H, W), jnp.float32)
    params = init_params(kp, feature_dim, n_classes)

    out = jax.block_until_ready(stego_seg_head(x, params))
    assert out.shape == (B, n_classes, H, W)

    # Tight check vs a reference using the same bf16 operand quantization.
    ref_q = reference_jax(x, params, matmul_dtype=jnp.bfloat16)
    assert jnp.allclose(out, ref_q, atol=2e-3, rtol=2e-3), \
        float(jnp.max(jnp.abs(out - ref_q)))
    # Loose sanity check vs the full-f32 reference (bf16 cast tolerance).
    ref_f = reference_jax(x, params, matmul_dtype=jnp.float32)
    assert jnp.allclose(out, ref_f, atol=1.5e-1, rtol=1e-1), \
        float(jnp.max(jnp.abs(out - ref_f)))

    print("KERNEL_OK")
</pallas_src>

<mosaic_0001>
module attributes {stable_mosaic.version = 11 : i64} {
  func.func @_stego_kernel(%arg0: i32, %arg1: i32, %arg2: memref<1x32x256xbf16, #tpu.memory_space<vmem>>, %arg3: memref<40x32xbf16, #tpu.memory_space<vmem>>, %arg4: memref<32x1xf32, #tpu.memory_space<vmem>>, %arg5: memref<8x32xbf16, #tpu.memory_space<vmem>>, %arg6: memref<8x1xf32, #tpu.memory_space<vmem>>, %arg7: memref<1x8x256xf32, #tpu.memory_space<vmem>>) attributes {dimension_semantics = [#tpu.dimension_semantics<parallel>, #tpu.dimension_semantics<parallel>], iteration_bounds = array<i64: 2, 1>, scalar_prefetch = 0 : i64, scratch_operands = 0 : i64, tpu.core_type = #tpu.core_type<tc>, window_params = [{transform_indices = @transform_0, window_bounds = array<i64: 1, 32, 256>}, {pipeline_mode = #tpu.pipeline_mode<synchronous>, transform_indices = @transform_1, window_bounds = array<i64: 40, 32>}, {pipeline_mode = #tpu.pipeline_mode<synchronous>, transform_indices = @transform_2, window_bounds = array<i64: 32, 1>}, {pipeline_mode = #tpu.pipeline_mode<synchronous>, transform_indices = @transform_3, window_bounds = array<i64: 8, 32>}, {pipeline_mode = #tpu.pipeline_mode<synchronous>, transform_indices = @transform_4, window_bounds = array<i64: 8, 1>}, {transform_indices = @transform_5, window_bounds = array<i64: 1, 8, 256>}]} {
    %c0 = arith.constant 0 : index
    %c0_0 = arith.constant 0 : index
    %c0_1 = arith.constant 0 : index
    %0 = vector.load %arg2[%c0, %c0_0, %c0_1] : memref<1x32x256xbf16, #tpu.memory_space<vmem>>, vector<1x32x256xbf16>
    %1 = vector.shape_cast %0 : vector<1x32x256xbf16> to vector<32x256xbf16>
    %c0_2 = arith.constant 0 : index
    %c0_3 = arith.constant 0 : index
    %2 = vector.load %arg3[%c0_2, %c0_3] : memref<40x32xbf16, #tpu.memory_space<vmem>>, vector<40x32xbf16>
    %cst = arith.constant dense<0.000000e+00> : vector<40x256xf32>
    %3 = tpu.matmul %2, %1, %cst {dimension_numbers = #tpu.dot_dimension_numbers<[1], [0], [0], [1], [0, 0, 1, 1], [], []>} : vector<40x32xbf16>, vector<32x256xbf16>, vector<40x256xf32> -> vector<40x256xf32>
    %4 = vector.extract_strided_slice %3 {offsets = [0, 0], sizes = [8, 256], strides = [1, 1]} : vector<40x256xf32> to vector<8x256xf32>
    %5 = vector.extract_strided_slice %3 {offsets = [8, 0], sizes = [32, 256], strides = [1, 1]} : vector<40x256xf32> to vector<32x256xf32>
    %c0_4 = arith.constant 0 : index
    %c0_5 = arith.constant 0 : index
    %6 = vector.load %arg4[%c0_4, %c0_5] : memref<32x1xf32, #tpu.memory_space<vmem>>, vector<32x1xf32>
    %7 = vector.broadcast %6 : vector<32x1xf32> to vector<32x256xf32>
    %8 = arith.addf %5, %7 : vector<32x256xf32>
    %cst_6 = arith.constant 0.000000e+00 : f32
    %9 = vector.broadcast %cst_6 : f32 to vector<32x256xf32>
    %10 = arith.maximumf %8, %9 : vector<32x256xf32>
    %c0_7 = arith.constant 0 : index
    %c0_8 = arith.constant 0 : index
    %11 = vector.load %arg5[%c0_7, %c0_8] : memref<8x32xbf16, #tpu.memory_space<vmem>>, vector<8x32xbf16>
    %12 = arith.truncf %10 : vector<32x256xf32> to vector<32x256xbf16>
    %cst_9 = arith.constant dense<0.000000e+00> : vector<8x256xf32>
    %13 = tpu.matmul %11, %12, %cst_9 {dimension_numbers = #tpu.dot_dimension_numbers<[1], [0], [0], [1], [0, 0, 1, 1], [], []>} : vector<8x32xbf16>, vector<32x256xbf16>, vector<8x256xf32> -> vector<8x256xf32>
    %14 = arith.addf %4, %13 : vector<8x256xf32>
    %c0_10 = arith.constant 0 : index
    %c0_11 = arith.constant 0 : index
    %15 = vector.load %arg6[%c0_10, %c0_11] : memref<8x1xf32, #tpu.memory_space<vmem>>, vector<8x1xf32>
    %16 = vector.broadcast %15 : vector<8x1xf32> to vector<8x256xf32>
    %17 = arith.addf %14, %16 : vector<8x256xf32>
    %c0_12 = arith.constant 0 : index
    %c0_13 = arith.constant 0 : index
    %c0_14 = arith.constant 0 : index
    %18 = vector.load %arg7[%c0_12, %c0_13, %c0_14] : memref<1x8x256xf32, #tpu.memory_space<vmem>>, vector<1x8x256xf32>
    %19 = vector.shape_cast %18 : vector<1x8x256xf32> to vector<8x256xf32>
    %20 = vector.shape_cast %17 : vector<8x256xf32> to vector<1x8x256xf32>
    tpu.vector_store %arg7[%c0_12, %c0_13, %c0_14], %20 {strides = array<i32>} : memref<1x8x256xf32, #tpu.memory_space<vmem>>, vector<1x8x256xf32>,
    return
  }
  func.func @transform_0(%arg0: i32, %arg1: i32) -> (i32, i32, i32) {
    %c0_i32 = arith.constant 0 : i32
    %c0_i32_0 = arith.constant 0 : i32
    return %arg0, %c0_i32, %arg1 : i32, i32, i32
  }
  func.func @transform_1(%arg0: i32, %arg1: i32) -> (i32, i32) {
    %c0_i32 = arith.constant 0 : i32
    %c0_i32_0 = arith.constant 0 : i32
    %c0_i32_1 = arith.constant 0 : i32
    return %c0_i32, %c0_i32_0 : i32, i32
  }
  func.func @transform_2(%arg0: i32, %arg1: i32) -> (i32, i32) {
    %c0_i32 = arith.constant 0 : i32
    %c0_i32_0 = arith.constant 0 : i32
    %c0_i32_1 = arith.constant 0 : i32
    return %c0_i32, %c0_i32_0 : i32, i32
  }
  func.func @transform_3(%arg0: i32, %arg1: i32) -> (i32, i32) {
    %c0_i32 = arith.constant 0 : i32
    %c0_i32_0 = arith.constant 0 : i32
    %c0_i32_1 = arith.constant 0 : i32
    return %c0_i32, %c0_i32_0 : i32, i32
  }
  func.func @transform_4(%arg0: i32, %arg1: i32) -> (i32, i32) {
    %c0_i32 = arith.constant 0 : i32
    %c0_i32_0 = arith.constant 0 : i32
    %c0_i32_1 = arith.constant 0 : i32
    return %c0_i32, %c0_i32_0 : i32, i32
  }
  func.func @transform_5(%arg0: i32, %arg1: i32) -> (i32, i32, i32) {
    %c0_i32 = arith.constant 0 : i32
    %c0_i32_0 = arith.constant 0 : i32
    return %arg0, %c0_i32, %arg1 : i32, i32, i32
  }
}

</mosaic_0001>

<llo_original>
// kernel: tpu_custom_call.1
$region0: #{tpu_custom_call.1}
  #allocation0 [shape = 'u32[]', space=smem, size = 0x4, offset = 0x4, fixed_abs, tag = 'smem constant byte address 0x4 - core index']
  #allocation1 [shape = 'u32[72,128]{1,0:T(1,128)}', space=vmem, size = 0x9000, scoped, tag = 'internal scratch']
  %s0 = inlined_call_operand.vmem [shape: bf16[2,32,256], index: 0, kind: input, shape index: {}]
  %s1 = inlined_call_operand.vmem [shape: bf16[40,32], index: 1, kind: input, shape index: {}]
  %s2 = inlined_call_operand.vmem [shape: f32[32,1], index: 2, kind: input, shape index: {}]
  %s3 = inlined_call_operand.vmem [shape: bf16[8,32], index: 3, kind: input, shape index: {}]
  %s4 = inlined_call_operand.vmem [shape: f32[8,1], index: 4, kind: input, shape index: {}]
  %s5 = inlined_call_operand.hbm [shape: f32[2,8,256], index: 5, kind: output, shape index: {}]
  %s6 = sld [smem:[#allocation0]]
  $region53: #{tpu_custom_call.1} parent=0
    _
  %s8 = ssub.s32 1, %s6
  %s9 = scalar_select 0, %s8, %s6
  $region1: #{tpu_custom_call.1} parent=0
    #allocation2 [shape = 'u8[16384]{0}', space=vmem, size = 0x4000, scoped, tag = 'output window, operand 0']
    #allocation3 [shape = 's32[2]{0}', space=sflag, size = 0x8, scoped, tag = 'scoped memory for tpu_custom_call.1']
    %10 = vsyncpa [#allocation3], 0
    %s11 = scalar_lea.sflag [#allocation3], 1
    %12 = vsyncpa %s11, 0
    loop: start=0, step=1, limit=4
    $region2: #{tpu_custom_call.1} parent=1 // loop_pre_header
      _
    $region3: #{tpu_custom_call.1} parent=1 // loop_header
      %s14 = sphi 0, %s18
      %p15 = scmp.ge.s32.totalorder %s14, 4
      %s21 = sphi 0, %s33
      %s22 = sphi 0, %s29
      %s23 = sphi 0, %s21
      %s24 = sphi 0, %s22
      %s25 = sphi 0, %s23
      %s26 = sphi 0, %s24
      %s38 = sphi 0, %s40
      %s41 = sphi 0, %s38
      %s42 = sphi 0, %s41
      %s58 = sphi 0, %s42
      %s62 = sphi 0, %s62
      %s64 = sphi 0, %s62
      %s65 = sphi 0, %s64
      %s79 = sphi 0, %s65
      %s83 = sphi 0, %s83
      %s85 = sphi 0, %s83
      %s86 = sphi 0, %s85
      %s100 = sphi 0, %s86
      %s104 = sphi 0, %s104
      %s106 = sphi 0, %s104
      %s107 = sphi 0, %s106
      %s121 = sphi 0, %s107
      %s125 = sphi 0, %s125
      %s127 = sphi 0, %s125
      %s128 = sphi 0, %s127
      %s142 = sphi 0, %s128
      %s150 = sphi 0, %s152
      %s153 = sphi 0, %s150
      %s154 = sphi 0, %s153
      %s170 = sphi 0, %s154
    $region4: #{tpu_custom_call.1} parent=1 // loop_header_branch
      %17 = sbr.rel (%p15) target = $region8
    $region5: #{tpu_custom_call.1} parent=1 // loop_body
      %s19 = ssub.s32 %s14, 1
      %s20 = ssub.s32 %s14, 2
      %s27 = sadd.s32 1, %s22
      %p28 = scmp.ge.s32.totalorder %s27, 1
      %s29 = scalar_select %p28, 0, %s27
      %s30 = sadd.s32 1, %s21
      %s31 = scalar_select %p28, %s30, %s21
      %p32 = scmp.ge.s32.totalorder %s31, 2
      %s33 = scalar_select %p32, 0, %s31
      %s34 = ssub.s32 %s21, %s33
      %s35 = ssub.s32 %s22, %s29
      %s36 = sor.u32 %s34, %s35
      %p37 = scmp.eq.s32.totalorder %s36, 0
      %s39 = sadd.s32 %s38, 1
      %s40 = scalar_select %p37, %s38, %s39
      %p43 = pneg %p37
      %p44 = scmp.eq.s32.totalorder %s14, 1
      %p45 = por %p43, %p44
      %p46 = scmp.ne.s32.totalorder %s38, %s41
      %p47 = scmp.eq.s32.totalorder %s14, 0
      %p48 = por %p46, %p47
      %p49 = scmp.ne.s32.totalorder %s38, %s41
      %p50 = scmp.eq.s32.totalorder %s19, 1
      %p51 = por %p49, %p50
      %p52 = scmp.ne.s32.totalorder %s41, %s42
      %p53 = scmp.eq.s32.totalorder %s19, 0
      %p54 = por %p52, %p53
      %p55 = scmp.ne.s32.totalorder %s41, %s42
      %p56 = scmp.eq.s32.totalorder %s20, 1
      %p57 = por %p55, %p56
      %p59 = scmp.ne.s32.totalorder %s42, %s58
      %p60 = scmp.eq.s32.totalorder %s20, 0
      %p61 = por %p59, %p60
      %s63 = sadd.s32 %s62, 1
      %p66 = scmp.eq.s32.totalorder %s14, 1
      %p67 = scmp.ne.s32.totalorder %s62, %s64
      %p68 = scmp.eq.s32.totalorder %s14, 0
      %p69 = por %p67, %p68
      %p70 = scmp.ne.s32.totalorder %s62, %s64
      %p71 = scmp.eq.s32.totalorder %s19, 1
      %p72 = por %p70, %p71
      %p73 = scmp.ne.s32.totalorder %s64, %s65
      %p74 = scmp.eq.s32.totalorder %s19, 0
      %p75 = por %p73, %p74
      %p76 = scmp.ne.s32.totalorder %s64, %s65
      %p77 = scmp.eq.s32.totalorder %s20, 1
      %p78 = por %p76, %p77
      %p80 = scmp.ne.s32.totalorder %s65, %s79
      %p81 = scmp.eq.s32.totalorder %s20, 0
      %p82 = por %p80, %p81
      %s84 = sadd.s32 %s83, 1
      %p87 = scmp.eq.s32.totalorder %s14, 1
      %p88 = scmp.ne.s32.totalorder %s83, %s85
      %p89 = scmp.eq.s32.totalorder %s14, 0
      %p90 = por %p88, %p89
      %p91 = scmp.ne.s32.totalorder %s83, %s85
      %p92 = scmp.eq.s32.totalorder %s19, 1
      %p93 = por %p91, %p92
      %p94 = scmp.ne.s32.totalorder %s85, %s86
      %p95 = scmp.eq.s32.totalorder %s19, 0
      %p96 = por %p94, %p95
      %p97 = scmp.ne.s32.totalorder %s85, %s86
      %p98 = scmp.eq.s32.totalorder %s20, 1
      %p99 = por %p97, %p98
      %p101 = scmp.ne.s32.totalorder %s86, %s100
      %p102 = scmp.eq.s32.totalorder %s20, 0
      %p103 = por %p101, %p102
      %s105 = sadd.s32 %s104, 1
      %p108 = scmp.eq.s32.totalorder %s14, 1
      %p109 = scmp.ne.s32.totalorder %s104, %s106
      %p110 = scmp.eq.s32.totalorder %s14, 0
      %p111 = por %p109, %p110
      %p112 = scmp.ne.s32.totalorder %s104, %s106
      %p113 = scmp.eq.s32.totalorder %s19, 1
      %p114 = por %p112, %p113
      %p115 = scmp.ne.s32.totalorder %s106, %s107
      %p116 = scmp.eq.s32.totalorder %s19, 0
      %p117 = por %p115, %p116
      %p118 = scmp.ne.s32.totalorder %s106, %s107
      %p119 = scmp.eq.s32.totalorder %s20, 1
      %p120 = por %p118, %p119
      %p122 = scmp.ne.s32.totalorder %s107, %s121
      %p123 = scmp.eq.s32.totalorder %s20, 0
      %p124 = por %p122, %p123
      %s126 = sadd.s32 %s125, 1
      %p129 = scmp.eq.s32.totalorder %s14, 1
      %p130 = scmp.ne.s32.totalorder %s125, %s127
      %p131 = scmp.eq.s32.totalorder %s14, 0
      %p132 = por %p130, %p131
      %p133 = scmp.ne.s32.totalorder %s125, %s127
      %p134 = scmp.eq.s32.totalorder %s19, 1
      %p135 = por %p133, %p134
      %p136 = scmp.ne.s32.totalorder %s127, %s128
      %p137 = scmp.eq.s32.totalorder %s19, 0
      %p138 = por %p136, %p137
      %p139 = scmp.ne.s32.totalorder %s127, %s128
      %p140 = scmp.eq.s32.totalorder %s20, 1
      %p141 = por %p139, %p140
      %p143 = scmp.ne.s32.totalorder %s128, %s142
      %p144 = scmp.eq.s32.totalorder %s20, 0
      %p145 = por %p143, %p144
      %s146 = ssub.s32 %s21, %s33
      %s147 = ssub.s32 %s22, %s29
      %s148 = sor.u32 %s146, %s147
      %p149 = scmp.eq.s32.totalorder %s148, 0
      %s151 = sadd.s32 %s150, 1
      %s152 = scalar_select %p149, %s150, %s151
      %p155 = pneg %p149
      %p156 = scmp.eq.s32.totalorder %s14, 1
      %p157 = por %p155, %p156
      %p158 = scmp.ne.s32.totalorder %s150, %s153
      %p159 = scmp.eq.s32.totalorder %s14, 0
      %p160 = por %p158, %p159
      %p161 = scmp.ne.s32.totalorder %s150, %s153
      %p162 = scmp.eq.s32.totalorder %s19, 1
      %p163 = por %p161, %p162
      %p164 = scmp.ne.s32.totalorder %s153, %s154
      %p165 = scmp.eq.s32.totalorder %s19, 0
      %p166 = por %p164, %p165
      %p167 = scmp.ne.s32.totalorder %s153, %s154
      %p168 = scmp.eq.s32.totalorder %s20, 1
      %p169 = por %p167, %p168
      %p171 = scmp.ne.s32.totalorder %s154, %s170
      %p172 = scmp.eq.s32.totalorder %s20, 0
      %p173 = por %p171, %p172
      %p174 = scmp.le.s32.totalorder 1, %s14
      %p175 = scmp.lt.s32.totalorder %s14, 3
      %p176 = pnand %p174, %p175
      %p177 = pneg %p176
      // Predicated region
      $region9: #{tpu_custom_call.1} parent=5 // pred_check
        _
      $region10: #{tpu_custom_call.1} parent=5 // pred_check_branch
        %179 = sbr.rel (%p176) target = $region12
      $region11: #{tpu_custom_call.1} parent=5 // pred_region
        %s180 = ssub.s32 %s14, 1
        // Predicated region
        $region13: #{tpu_custom_call.1} parent=11 // pred_check
          %p181 = pneg %p75
        $region14: #{tpu_custom_call.1} parent=11 // pred_check_branch
          %183 = sbr.rel (%p181) target = $region16
        $region15: #{tpu_custom_call.1} parent=11 // pred_region
          _
        $region16: #{tpu_custom_call.1} parent=11 // pred_fallthru
          _
        // Predicated region
        $region17: #{tpu_custom_call.1} parent=11 // pred_check
          %p184 = pneg %p96
        $region18: #{tpu_custom_call.1} parent=11 // pred_check_branch
          %186 = sbr.rel (%p184) target = $region20
        $region19: #{tpu_custom_call.1} parent=11 // pred_region
          _
        $region20: #{tpu_custom_call.1} parent=11 // pred_fallthru
          _
        // Predicated region
        $region21: #{tpu_custom_call.1} parent=11 // pred_check
          %p187 = pneg %p117
        $region22: #{tpu_custom_call.1} parent=11 // pred_check_branch
          %189 = sbr.rel (%p187) target = $region24
        $region23: #{tpu_custom_call.1} parent=11 // pred_region
          _
        $region24: #{tpu_custom_call.1} parent=11 // pred_fallthru
          _
        // Predicated region
        $region25: #{tpu_custom_call.1} parent=11 // pred_check
          %p190 = pneg %p138
        $region26: #{tpu_custom_call.1} parent=11 // pred_check_branch
          %192 = sbr.rel (%p190) target = $region28
        $region27: #{tpu_custom_call.1} parent=11 // pred_region
          _
        $region28: #{tpu_custom_call.1} parent=11 // pred_fallthru
          _
      $region12: #{tpu_custom_call.1} parent=5 // pred_fallthru
        _
      %p193 = scmp.lt.s32.totalorder %s14, 2
      // Predicated region
      $region29: #{tpu_custom_call.1} parent=5 // pred_check
        %p194 = pneg %p193
      $region30: #{tpu_custom_call.1} parent=5 // pred_check_branch
        %196 = sbr.rel (%p194) target = $region32
      $region31: #{tpu_custom_call.1} parent=5 // pred_region
        // Predicated region
        $region33: #{tpu_custom_call.1} parent=31 // pred_check
          %p197 = pneg %p48
        $region34: #{tpu_custom_call.1} parent=31 // pred_check_branch
          %199 = sbr.rel (%p197) target = $region36
        $region35: #{tpu_custom_call.1} parent=31 // pred_region
          %s200 = smul.u32 2, %s22
          %p201 = scmp.lt.s32.totalorder %s21, 1
          %s202 = scalar_select %p201, %s21, 1
          %p203 = scmp.lt.s32.totalorder %s200, 1
          %s204 = scalar_select %p203, %s200, 1
          %s205 = smul.addr %s202, 8
          %s206 = sadd.s32 %s204, %s205
          %s207 = smul.addr %s206, 4
          %s208 = scalar_lea.vmem %s0, %s207
          %s209 = smul.u32 2, %s22
        $region36: #{tpu_custom_call.1} parent=31 // pred_fallthru
          _
      $region32: #{tpu_custom_call.1} parent=5 // pred_fallthru
        _
      %p210 = scmp.le.s32.totalorder 1, %s14
      %p211 = scmp.lt.s32.totalorder %s14, 3
      %p212 = pnand %p210, %p211
      %p213 = pneg %p212
      // Predicated region
      $region37: #{tpu_custom_call.1} parent=5 // pred_check
        _
      $region38: #{tpu_custom_call.1} parent=5 // pred_check_branch
        %215 = sbr.rel (%p212) target = $region40
      $region39: #{tpu_custom_call.1} parent=5 // pred_region
        %s216 = ssub.s32 %s14, 1
        %s217 = smul.u32 2, %s24
        %p218 = scmp.lt.s32.totalorder %s23, 1
        %s219 = scalar_select %p218, %s23, 1
        %p220 = scmp.lt.s32.totalorder %s217, 1
        %s221 = scalar_select %p220, %s217, 1
        %s222 = smul.addr %s219, 8
        %s223 = sadd.s32 %s221, %s222
        %s224 = smul.addr %s223, 4
        %s225 = scalar_lea.vmem %s0, %s224
        %p226 = pneg %p54
        %p227 = pneg %p51
        %p228 = pneg %p75
        %p229 = pneg %p72
        %p230 = pneg %p96
        %p231 = pneg %p93
        %p232 = pneg %p117
        %p233 = pneg %p114
        %p234 = pneg %p138
        %p235 = pneg %p135
        %p236 = pneg %p166
        %p237 = pneg %p163
        %s238 = sand.u32 %s153, 1
        %s239 = scalar_lea.sflag [#allocation3], %s238
        %s240 = sand.u32 %s153, 1
        %s241 = smul.addr %s240, 16
        %s242 = scalar_lea.vmem [#allocation2], %s241
        %s243 = smul.u32 2, %s24
        %p244 = scmp.lt.s32.totalorder %s23, 1
        %s245 = scalar_select %p244, %s23, 1
        %p246 = scmp.lt.s32.totalorder %s243, 1
        %s247 = scalar_select %p246, %s243, 1
        %s248 = smul.addr %s245, 8
        %s249 = sadd.s32 %s247, %s248
        %s250 = smul.addr %s249, 4
        %s251 = scalar_lea.vmem %s0, %s250
        %s252 = smul.u32 2, %s24
        %s253 = smul.u32 2, %s24
        %v255 = vld [vmem:[%s251] sm:$0xff]
        %v256 = vld [vmem:[%s251 + $0x8] sm:$0xff]
        %v257 = vld [vmem:[%s251 + $0x10] sm:$0xff]
        %v258 = vld [vmem:[%s251 + $0x18] sm:$0xff]
        %v259 = vld [vmem:[%s1] sm:$0xf]
        %v260 = vld [vmem:[%s1 + $0x4] sm:$0xf]
        %v261 = vld [vmem:[%s1 + $0x8] sm:$0xf]
        %v262 = vld [vmem:[%s1 + $0xc] sm:$0xf]
        %v263 = vld [vmem:[%s1 + $0x10] sm:$0xf]
        %v269 = vunpack.c.l.b16 %v259
        %v270 = vunpack.c.l.b16 %v260
        %v271 = vunpack.c.l.b16 %v261
        %v272 = vunpack.c.l.b16 %v262
        %v273 = vunpack.c.l.b16 %v263
        %v274 = vpack.c.b16 %v270, %v269
        %v275 = vpack.c.b16 %v272, %v271
        %v276 = vpack.c.b16 %v273, %v273
        %v281 = vunpack.c.l.b16 %v255
        %v282 = vunpack.c.h.b16 %v255
        %v283 = vunpack.c.l.b16 %v256
        %v284 = vunpack.c.h.b16 %v256
        %v285 = vunpack.c.l.b16 %v257
        %v286 = vunpack.c.h.b16 %v257
        %v287 = vunpack.c.l.b16 %v258
        %v288 = vunpack.c.h.b16 %v258
        %v289 = vpack.c.b16 %v283, %v281
        %v290 = vpack.c.b16 %v284, %v282
        %v291 = vpack.c.b16 %v287, %v285
        %v292 = vpack.c.b16 %v288, %v286
        %vm297 = vcmask 261120
        %v299 = vsel %vm297, %v274, 0
        %v302 = vsel %vm297, %v275, 0
        %v305 = vsel %vm297, %v276, 0
        %307 = vmatpush.bf16.msra.mxu0 0
        %308 = vmatpush.bf16.msra.mxu0 0
        %309 = vmatpush.bf16.msra.mxu0 0
        %310 = vmatpush.bf16.msra.mxu0 0
        %311 = vmatpush.bf16.msra.mxu0 0
        %312 = vmatpush.bf16.msra.mxu0 0
        %313 = vmatpush.bf16.msra.mxu0 %v291
        %314 = vmatpush.bf16.msra.mxu0 %v289
        %315 = vmatmul.bf16.gmra.mxu0 %v299
        %v316 = vpop.f32.mrf.mxu0
        %v317 = vadd.f32 0.0, %v316
        %v318 = vpop.f32.mrf.mxu0
        %v319 = vadd.f32 0.0, %v318
        %320 = vmatmul.bf16.gmra.mxu0 %v302
        %v321 = vpop.f32.mrf.mxu0
        %v322 = vadd.f32 0.0, %v321
        %v323 = vpop.f32.mrf.mxu0
        %v324 = vadd.f32 0.0, %v323
        %325 = vmatmul.bf16.gmra.mxu0 %v305
        %v326 = vpop.f32.mrf.mxu0
        %v327 = vadd.f32 0.0, %v326
        %v328 = vpop.f32.mrf.mxu0
        %329 = vdwg.mxu0
        %330 = vmatpush.bf16.msra.mxu0 0
        %331 = vmatpush.bf16.msra.mxu0 0
        %332 = vmatpush.bf16.msra.mxu0 0
        %333 = vmatpush.bf16.msra.mxu0 0
        %334 = vmatpush.bf16.msra.mxu0 0
        %335 = vmatpush.bf16.msra.mxu0 0
        %336 = vmatpush.bf16.msra.mxu0 %v292
        %337 = vmatpush.bf16.msra.mxu0 %v290
        %338 = vmatmul.bf16.gmra.mxu0 %v299
        %v339 = vpop.f32.mrf.mxu0
        %v340 = vadd.f32 0.0, %v339
        %v341 = vpop.f32.mrf.mxu0
        %v342 = vadd.f32 0.0, %v341
        %343 = vmatmul.bf16.gmra.mxu0 %v302
        %v344 = vpop.f32.mrf.mxu0
        %v345 = vadd.f32 0.0, %v344
        %v346 = vpop.f32.mrf.mxu0
        %v347 = vadd.f32 0.0, %v346
        %348 = vmatmul.bf16.gmra.mxu0 %v305
        %v349 = vpop.f32.mrf.mxu0
        %v350 = vadd.f32 0.0, %v349
        %v351 = vpop.f32.mrf.mxu0
        %352 = vdwg.mxu0
        %v353 = vld [vmem:[%s2] sm:$0xff]
        %v354 = vld [vmem:[%s2 + $0x8] sm:$0xff]
        %v355 = vld [vmem:[%s2 + $0x10] sm:$0xff]
        %v356 = vld [vmem:[%s2 + $0x18] sm:$0xff]
        %358 = vset.pattern.permute.xlu0 0
        %359 = vperm.xlu0 %358, %v353
        %v360 = vpop.permute.xlu0 %359
        %363 = vset.pattern.permute.xlu0 0
        %364 = vperm.xlu0 %363, %v354
        %v365 = vpop.permute.xlu0 %364
        %368 = vset.pattern.permute.xlu0 0
        %369 = vperm.xlu0 %368, %v355
        %v370 = vpop.permute.xlu0 %369
        %373 = vset.pattern.permute.xlu0 0
        %374 = vperm.xlu0 %373, %v356
        %v375 = vpop.permute.xlu0 %374
        %v377 = vadd.f32 %v319, %v360
        %v378 = vadd.f32 %v342, %v360
        %v379 = vadd.f32 %v322, %v365
        %v380 = vadd.f32 %v345, %v365
        %v381 = vadd.f32 %v324, %v370
        %v382 = vadd.f32 %v347, %v370
        %v383 = vadd.f32 %v327, %v375
        %v384 = vadd.f32 %v350, %v375
        %v385 = vmax.f32 %v377, 0.0
        %v386 = vmax.f32 %v378, 0.0
        %v387 = vmax.f32 %v379, 0.0
        %v388 = vmax.f32 %v380, 0.0
        %v389 = vmax.f32 %v381, 0.0
        %v390 = vmax.f32 %v382, 0.0
        %v391 = vmax.f32 %v383, 0.0
        %v392 = vmax.f32 %v384, 0.0
        %v393 = vld [vmem:[%s3] sm:$0xf]
        %v394 = vpack.c.bf16 %v387, %v385
        %v395 = vpack.c.bf16 %v388, %v386
        %v396 = vpack.c.bf16 %v391, %v389
        %v397 = vpack.c.bf16 %v392, %v390
        %v399 = vsel %vm297, %v393, 0
        %401 = vmatpush.bf16.msra.mxu0 0
        %402 = vmatpush.bf16.msra.mxu0 0
        %403 = vmatpush.bf16.msra.mxu0 0
        %404 = vmatpush.bf16.msra.mxu0 0
        %405 = vmatpush.bf16.msra.mxu0 0
        %406 = vmatpush.bf16.msra.mxu0 0
        %407 = vmatpush.bf16.msra.mxu0 %v396
        %408 = vmatpush.bf16.msra.mxu0 %v394
        %409 = vmatmul.bf16.gmra.mxu0 %v399
        %v410 = vpop.f32.mrf.mxu0
        %v411 = vadd.f32 0.0, %v410
        %v412 = vpop.f32.mrf.mxu0
        %413 = vdwg.mxu0
        %414 = vmatpush.bf16.msra.mxu0 0
        %415 = vmatpush.bf16.msra.mxu0 0
        %416 = vmatpush.bf16.msra.mxu0 0
        %417 = vmatpush.bf16.msra.mxu0 0
        %418 = vmatpush.bf16.msra.mxu0 0
        %419 = vmatpush.bf16.msra.mxu0 0
        %420 = vmatpush.bf16.msra.mxu0 %v397
        %421 = vmatpush.bf16.msra.mxu0 %v395
        %422 = vmatmul.bf16.gmra.mxu0 %v399
        %v423 = vpop.f32.mrf.mxu0
        %v424 = vadd.f32 0.0, %v423
        %v425 = vpop.f32.mrf.mxu0
        %426 = vdwg.mxu0
        %v427 = vadd.f32 %v317, %v411
        %v428 = vadd.f32 %v340, %v424
        %v429 = vld [vmem:[%s4] sm:$0xff]
        %431 = vset.pattern.permute.xlu0 0
        %432 = vperm.xlu0 %431, %v429
        %v433 = vpop.permute.xlu0 %432
        %v435 = vadd.f32 %v427, %v433
        %v436 = vadd.f32 %v428, %v433
        %437 = vst [vmem:[%s242] sm:$0xff] %v435
        %438 = vst [vmem:[%s242 + $0x8] sm:$0xff] %v436
        %s439 = sand.u32 %s153, 1
        %s440 = scalar_lea.sflag [#allocation3], %s439
        %s441 = sand.u32 %s153, 1
        %s442 = smul.addr %s441, 16
        %s443 = scalar_lea.vmem [#allocation2], %s442
        // Predicated region
        $region41: #{tpu_custom_call.1} parent=39 // pred_check
          %p444 = pneg %p163
        $region42: #{tpu_custom_call.1} parent=39 // pred_check_branch
          %446 = sbr.rel (%p444) target = $region44
        $region43: #{tpu_custom_call.1} parent=39 // pred_region
          %s447 = smul.u32 2, %s24
          %449 = vsyncadd %s440, 0
          %s450 = smul.addr %s23, 2
          %s451 = sadd.s32 %s447, %s450
          %s452 = smul.addr %s451, 8
          %s453 = scalar_lea.hbm %s5, %s452
          %s455 = sshll.u32 %s443, 4
          %s456 = int_to_ptr.vmem [resolvable:$true] %s455
          %s457 = sshll.u32 %s453, 4
          %s458 = int_to_ptr.hbm [resolvable:$true] %s457
          %460 = dma.vmem_to_hbm [thread:$0]  %s456, 256, %s458, %s440
        $region44: #{tpu_custom_call.1} parent=39 // pred_fallthru
          _
      $region40: #{tpu_custom_call.1} parent=5 // pred_fallthru
        _
      %p461 = scmp.le.s32.totalorder 2, %s14
      // Predicated region
      $region45: #{tpu_custom_call.1} parent=5 // pred_check
        %p462 = pneg %p461
      $region46: #{tpu_custom_call.1} parent=5 // pred_check_branch
        %464 = sbr.rel (%p462) target = $region48
      $region47: #{tpu_custom_call.1} parent=5 // pred_region
        %s465 = ssub.s32 %s14, 2
        // Predicated region
        $region49: #{tpu_custom_call.1} parent=47 // pred_check
          %p466 = pneg %p169
        $region50: #{tpu_custom_call.1} parent=47 // pred_check_branch
          %468 = sbr.rel (%p466) target = $region52
        $region51: #{tpu_custom_call.1} parent=47 // pred_region
          %s469 = sand.u32 %s154, 1
          %s470 = scalar_lea.sflag [#allocation3], %s469
          %s471 = sand.u32 %s154, 1
          %s472 = smul.addr %s471, 16
          %s473 = scalar_lea.vmem [#allocation2], %s472
          %475 = dma.done %s470, 256
        $region52: #{tpu_custom_call.1} parent=47 // pred_fallthru
          _
      $region48: #{tpu_custom_call.1} parent=5 // pred_fallthru
        _
    $region6: #{tpu_custom_call.1} parent=1 // loop_footer
      %s18 = sadd.s32 1, %s14
    $region7: #{tpu_custom_call.1} parent=1 // loop_footer_branch
      %13 = sbr.rel target = $region3
    $region8: #{tpu_custom_call.1} parent=1 // loop_exit
      _
    %476 = vsyncpa [#allocation3], 1
    %s477 = scalar_lea.sflag [#allocation3], 1
    %478 = vsyncpa %s477, 1

</llo_original>
